<compile_context>
chip_gen: v7x
topology: tpu7x:2x2x1
jax: 0.10.0
libtpu: 0.0.40
codegen_flags: <defaults>
</compile_context>

<pallas_src>
import functools

import jax
import jax.numpy as jnp
from jax.experimental import pallas as pl
from jax.experimental.pallas import tpu as pltpu

_EPS = 1e-5          # nn.GroupNorm default
_LANE = 128
_SUBLANE = 8


# --------------------------------------------------------------------------
# Hardware-aware budgets
# --------------------------------------------------------------------------
@functools.lru_cache(maxsize=None)
def _vmem_capacity_bytes():
    try:
        info = pltpu.get_tpu_info()
        cap = int(getattr(info, "vmem_capacity_bytes", 0) or 0)
        if cap > 0:
            return cap
    except Exception:
        pass
    return 64 * 1024 * 1024  # conservative fallback (v7x per-TC VMEM)


@functools.lru_cache(maxsize=None)
def _vmem_limit_bytes():
    # Scoped-VMEM cap handed to Mosaic; leave headroom below physical capacity.
    return min(int(_vmem_capacity_bytes() * 3 // 4), 100 * 1024 * 1024)


# --------------------------------------------------------------------------
# Kernels
# --------------------------------------------------------------------------
def _fused_kernel(x_ref, g_ref, b_ref, o_ref, *, inv_count):
    """Whole sample resident in VMEM: single-pass stats + folded affine.

    One HBM read + one HBM write per sample (vs 3 passes on the tiled path).
    """
    x = x_ref[0].astype(jnp.float32)                  # (R, L)
    s = jnp.sum(x)
    ss = jnp.sum(x * x)
    mean = s * inv_count
    var = ss * inv_count - mean * mean
    inv = jax.lax.rsqrt(var + _EPS)                   # EUP, effectively free
    scale = g_ref[...] * inv                          # (R, 1)
    shift = b_ref[...] - mean * scale                 # (R, 1)
    o_ref[0] = (x * scale + shift).astype(o_ref.dtype)


def _stats_kernel(x_ref, s_ref, ss_ref, *, hw, tile, mask_last):
    """Pass 1 (tiled path): accumulate per-sample sum / sum-of-squares."""
    @pl.when(pl.program_id(1) == 0)
    def _():
        s_ref[...] = jnp.zeros_like(s_ref)
        ss_ref[...] = jnp.zeros_like(ss_ref)

    x = x_ref[...].astype(jnp.float32)                # (1, C, T)
    if mask_last:
        # Ragged last tile: OOB lanes hold undefined data -> mask them to 0
        # so the sums are unperturbed (no wrapper-side padding pass needed).
        lane = jax.lax.broadcasted_iota(jnp.int32, x.shape, dimension=2)
        valid = (pl.program_id(1) * tile + lane) < hw
        x = jnp.where(valid, x, 0.0)
    s_ref[...] += jnp.sum(x, keepdims=True)           # (1, 1, 1)
    ss_ref[...] += jnp.sum(x * x, keepdims=True)


def _apply_kernel(x_ref, g_ref, b_ref, s_ref, ss_ref, o_ref, *, inv_count):
    """Pass 2 (tiled path): fold mean/var/affine per tile, y = x*scale + shift.

    Ragged last tile: garbage lanes produce garbage results whose OOB writes
    are clipped, so no masking is needed here.
    """
    x = x_ref[...].astype(jnp.float32)                # (1, C, T)
    mean = s_ref[...] * inv_count                     # (1, 1, 1)
    var = ss_ref[...] * inv_count - mean * mean
    inv = jax.lax.rsqrt(var + _EPS)                   # EUP slot
    scale = g_ref[...] * inv                          # (C,1)*(1,1,1) -> (1,C,1)
    shift = b_ref[...] - mean * scale                 # (1, C, 1)
    o_ref[...] = (x * scale + shift).astype(o_ref.dtype)


# --------------------------------------------------------------------------
# Wrapper-side tiling decisions
# --------------------------------------------------------------------------
def _choose_fold(c, hw, itemsize):
    """Fold spatial rows into the sublane axis for channel-light inputs.

    Only used when the fold is a free row-major reshape (H*W divisible so the
    lane axis stays a 128-multiple).  Returns fold factor r: view (C*r, HW/r).
    """
    target = _SUBLANE if itemsize >= 4 else 2 * _SUBLANE
    if c >= target or hw % _LANE != 0:
        return 1
    best = 1
    for fold in range(1, min(hw // _LANE, 64) + 1):
        if hw % fold == 0 and (hw // fold) % _LANE == 0:
            best = fold
            if c * fold >= target:
                break
    return best


def _pick_hw_tile(c, hw, itemsize):
    """HW tile for the tiled path: multiple of 128, ~2-4 MiB per (1,C,T) block."""
    limit = _vmem_limit_bytes()
    target = max(512 * 1024, min(4 * 1024 * 1024, limit // 16))
    per_lane = max(1, c) * max(itemsize, 4)           # f32 temps dominate in-kernel
    t = (target // (per_lane * _LANE)) * _LANE
    t = max(_LANE, t)
    hw_ceil = pl.cdiv(hw, _LANE) * _LANE
    return min(t, hw_ceil)


# --------------------------------------------------------------------------
# GroupNorm(1, C) forward
# --------------------------------------------------------------------------
def mod_layer_norm_pallas(x, weight, bias, *, force_tiled=False, hw_tile=None):
    """GroupNorm(num_groups=1, num_channels=C) over NCHW x, via Pallas on TPU."""
    n, c, h, w = x.shape
    hw = h * w
    itemsize = jnp.dtype(x.dtype).itemsize
    inv_count = 1.0 / float(c * hw)
    vmem_limit = _vmem_limit_bytes()

    g = weight.astype(jnp.float32)
    b = bias.astype(jnp.float32)

    # ---------------- fused single-pass path (dominant) ----------------
    fold = _choose_fold(c, hw, itemsize)
    rows, cols = c * fold, hw // fold
    rows_p = pl.cdiv(rows, _SUBLANE) * _SUBLANE
    cols_p = pl.cdiv(cols, _LANE) * _LANE
    blk_io = rows_p * cols_p * itemsize               # one in/out VMEM block
    blk_f32 = rows_p * cols_p * 4                     # in-kernel f32 temporaries
    fused_need = 4 * blk_io + 2 * blk_f32             # 2x in + 2x out (double buf)
    use_fused = (not force_tiled) and fused_need <= (vmem_limit * 7) // 10

    if use_fused:
        # TODO(synk): for N==1 on v7x, a C/HW-split grid would use both
        # TensorCores; with the fused single-sample grid one core is idle.
        x3 = x.reshape(n, rows, cols)                 # free row-major view
        g2 = jnp.repeat(g, fold).reshape(rows, 1)
        b2 = jnp.repeat(b, fold).reshape(rows, 1)
        out3 = pl.pallas_call(
            functools.partial(_fused_kernel, inv_count=inv_count),
            out_shape=jax.ShapeDtypeStruct((n, rows, cols), x.dtype),
            grid_spec=pltpu.PrefetchScalarGridSpec(
                num_scalar_prefetch=0,
                grid=(n,),
                in_specs=[
                    pl.BlockSpec((1, rows, cols), lambda i: (i, 0, 0)),
                    pl.BlockSpec((rows, 1), lambda i: (0, 0)),
                    pl.BlockSpec((rows, 1), lambda i: (0, 0)),
                ],
                out_specs=pl.BlockSpec((1, rows, cols), lambda i: (i, 0, 0)),
            ),
            compiler_params=pltpu.CompilerParams(
                dimension_semantics=("parallel",),
                vmem_limit_bytes=vmem_limit,
            ),
            cost_estimate=pl.CostEstimate(
                flops=5 * n * c * hw,
                transcendentals=n,
                bytes_accessed=2 * n * c * hw * itemsize,
            ),
        )(x3, g2, b2)
        return out3.reshape(n, c, h, w)

    # ---------------- tiled two-pass path (large samples) ----------------
    t = hw_tile if hw_tile is not None else _pick_hw_tile(c, hw, itemsize)
    assert t % _LANE == 0
    num_t = pl.cdiv(hw, t)
    mask_last = (hw % t) != 0

    x3 = x.reshape(n, c, hw)                          # free view
    g2 = g.reshape(c, 1)
    b2 = b.reshape(c, 1)

    # Pass 1: per-sample sum / sum-of-squares, accumulated over HW tiles.
    s, ss = pl.pallas_call(
        functools.partial(_stats_kernel, hw=hw, tile=t, mask_last=mask_last),
        out_shape=(
            jax.ShapeDtypeStruct((n, 1, 1), jnp.float32),
            jax.ShapeDtypeStruct((n, 1, 1), jnp.float32),
        ),
        grid_spec=pltpu.PrefetchScalarGridSpec(
            num_scalar_prefetch=0,
            grid=(n, num_t),
            in_specs=[pl.BlockSpec((1, c, t), lambda i, j: (i, 0, j))],
            out_specs=(
                pl.BlockSpec((1, 1, 1), lambda i, j: (i, 0, 0)),
                pl.BlockSpec((1, 1, 1), lambda i, j: (i, 0, 0)),
            ),
        ),
        compiler_params=pltpu.CompilerParams(
            dimension_semantics=("parallel", "arbitrary"),
            vmem_limit_bytes=vmem_limit,
        ),
        cost_estimate=pl.CostEstimate(
            flops=3 * n * c * hw,
            transcendentals=0,
            bytes_accessed=n * c * hw * itemsize,
        ),
    )(x3)

    # Pass 2: fold mean/var + affine per tile inside the kernel (no wrapper
    # math, no (N,C,1) scale/shift HBM round trip).
    out3 = pl.pallas_call(
        functools.partial(_apply_kernel, inv_count=inv_count),
        out_shape=jax.ShapeDtypeStruct((n, c, hw), x.dtype),
        grid_spec=pltpu.PrefetchScalarGridSpec(
            num_scalar_prefetch=0,
            grid=(n, num_t),
            in_specs=[
                pl.BlockSpec((1, c, t), lambda i, j: (i, 0, j)),
                pl.BlockSpec((c, 1), lambda i, j: (0, 0)),
                pl.BlockSpec((c, 1), lambda i, j: (0, 0)),
                pl.BlockSpec((1, 1, 1), lambda i, j: (i, 0, 0)),
                pl.BlockSpec((1, 1, 1), lambda i, j: (i, 0, 0)),
            ],
            out_specs=pl.BlockSpec((1, c, t), lambda i, j: (i, 0, j)),
        ),
        compiler_params=pltpu.CompilerParams(
            dimension_semantics=("parallel", "parallel"),
            vmem_limit_bytes=vmem_limit,
        ),
        cost_estimate=pl.CostEstimate(
            flops=3 * n * c * hw,
            transcendentals=n * num_t,
            bytes_accessed=2 * n * c * hw * itemsize,
        ),
    )(x3, g2, b2, s, ss)

    return out3.reshape(n, c, h, w)


def pre_norm(x, weight, bias, fn=lambda y: y, **kwargs):
    """PreNorm.forward: fn(ModLayerNorm(dim)(x), **kwargs)."""
    normed = mod_layer_norm_pallas(x, weight, bias)
    # TODO(synk): `fn` is an arbitrary wrapped module in the original code; it
    # is applied here in plain JAX (identity by default).
    return fn(normed, **kwargs)


# --------------------------------------------------------------------------
# Self-test
# --------------------------------------------------------------------------
def _reference(x, weight, bias):
    n, c, h, w = x.shape
    xf = x.reshape(n, -1).astype(jnp.float32)
    mean = xf.mean(axis=1, keepdims=True)
    var = ((xf - mean) ** 2).mean(axis=1, keepdims=True)
    xn = ((xf - mean) / jnp.sqrt(var + _EPS)).reshape(n, c, h, w)
    y = xn * weight[None, :, None, None] + bias[None, :, None, None]
    return y.astype(x.dtype)


if __name__ == "__main__":
    key = jax.random.PRNGKey(0)
    kx, kw, kb, kx2 = jax.random.split(key, 4)

    N, C, H, W = 2, 4, 16, 16
    x = jax.random.normal(kx, (N, C, H, W), dtype=jnp.float32)
    weight = jnp.ones((C,), jnp.float32) + 0.1 * jax.random.normal(kw, (C,))
    bias = 0.1 * jax.random.normal(kb, (C,))
    ref = _reference(x, weight, bias)

    # 1) Fused single-pass path (small-C fold: per-sample view (8, 128)).
    out_fused = jax.block_until_ready(pre_norm(x, weight, bias))
    assert jnp.allclose(out_fused, ref, atol=1e-4, rtol=1e-4), "fused mismatch"

    # 2) Tiled two-pass path, two full HW tiles.
    out_tiled = jax.block_until_ready(
        mod_layer_norm_pallas(x, weight, bias, force_tiled=True, hw_tile=128))
    assert jnp.allclose(out_tiled, ref, atol=1e-4, rtol=1e-4), "tiled mismatch"

    # 3) Non-128-multiple spatial extent (no wrapper pad/slice anywhere):
    #    fused full-block path and tiled ragged-last-tile (masked) path.
    H2 = W2 = 10
    x2 = jax.random.normal(kx2, (N, C, H2, W2), dtype=jnp.float32)
    ref2 = _reference(x2, weight, bias)
    out_f2 = jax.block_until_ready(mod_layer_norm_pallas(x2, weight, bias))
    assert jnp.allclose(out_f2, ref2, atol=1e-4, rtol=1e-4), "fused ragged mismatch"
    out_t2 = jax.block_until_ready(
        mod_layer_norm_pallas(x2, weight, bias, force_tiled=True, hw_tile=128))
    assert jnp.allclose(out_t2, ref2, atol=1e-4, rtol=1e-4), "tiled ragged mismatch"

    print("KERNEL_OK")
</pallas_src>

<mosaic_0001>
module attributes {stable_mosaic.version = 11 : i64} {
  func.func @_fused_kernel(%arg0: i32, %arg1: memref<1x8x128xf32, #tpu.memory_space<vmem>>, %arg2: memref<8x1xf32, #tpu.memory_space<vmem>>, %arg3: memref<8x1xf32, #tpu.memory_space<vmem>>, %arg4: memref<1x8x128xf32, #tpu.memory_space<vmem>>) attributes {dimension_semantics = [#tpu.dimension_semantics<parallel>], iteration_bounds = array<i64: 2>, scalar_prefetch = 0 : i64, scratch_operands = 0 : i64, tpu.core_type = #tpu.core_type<tc>, window_params = [{transform_indices = @transform_0, window_bounds = array<i64: 1, 8, 128>}, {pipeline_mode = #tpu.pipeline_mode<synchronous>, transform_indices = @transform_1, window_bounds = array<i64: 8, 1>}, {pipeline_mode = #tpu.pipeline_mode<synchronous>, transform_indices = @transform_2, window_bounds = array<i64: 8, 1>}, {transform_indices = @transform_3, window_bounds = array<i64: 1, 8, 128>}]} {
    %c0 = arith.constant 0 : index
    %c0_0 = arith.constant 0 : index
    %c0_1 = arith.constant 0 : index
    %0 = vector.load %arg1[%c0, %c0_0, %c0_1] : memref<1x8x128xf32, #tpu.memory_space<vmem>>, vector<1x8x128xf32>
    %1 = vector.shape_cast %0 : vector<1x8x128xf32> to vector<8x128xf32>
    %2 = vector.shape_cast %1 : vector<8x128xf32> to vector<1x8x128xf32>
    %cst = arith.constant dense<0.000000e+00> : vector<1xf32>
    %3 = vector.multi_reduction <add>, %2, %cst [1, 2] : vector<1x8x128xf32> to vector<1xf32>
    %4 = vector.shape_cast %3 : vector<1xf32> to vector<1x1x1xf32>
    %5 = vector.extract %4[0, 0, 0] : f32 from vector<1x1x1xf32>
    %6 = arith.mulf %1, %1 : vector<8x128xf32>
    %7 = vector.shape_cast %6 : vector<8x128xf32> to vector<1x8x128xf32>
    %cst_2 = arith.constant dense<0.000000e+00> : vector<1xf32>
    %8 = vector.multi_reduction <add>, %7, %cst_2 [1, 2] : vector<1x8x128xf32> to vector<1xf32>
    %9 = vector.shape_cast %8 : vector<1xf32> to vector<1x1x1xf32>
    %10 = vector.extract %9[0, 0, 0] : f32 from vector<1x1x1xf32>
    %cst_3 = arith.constant 9.765625E-4 : f32
    %11 = arith.mulf %5, %cst_3 : f32
    %cst_4 = arith.constant 9.765625E-4 : f32
    %12 = arith.mulf %10, %cst_4 : f32
    %13 = arith.mulf %11, %11 : f32
    %14 = arith.subf %12, %13 : f32
    %cst_5 = arith.constant 9.99999974E-6 : f32
    %15 = arith.addf %14, %cst_5 : f32
    %16 = math.rsqrt %15 : f32
    %c0_6 = arith.constant 0 : index
    %c0_7 = arith.constant 0 : index
    %17 = vector.load %arg2[%c0_6, %c0_7] : memref<8x1xf32, #tpu.memory_space<vmem>>, vector<8x1xf32>
    %18 = vector.broadcast %16 : f32 to vector<8x1xf32>
    %19 = arith.mulf %17, %18 : vector<8x1xf32>
    %c0_8 = arith.constant 0 : index
    %c0_9 = arith.constant 0 : index
    %20 = vector.load %arg3[%c0_8, %c0_9] : memref<8x1xf32, #tpu.memory_space<vmem>>, vector<8x1xf32>
    %21 = vector.broadcast %11 : f32 to vector<8x1xf32>
    %22 = arith.mulf %21, %19 : vector<8x1xf32>
    %23 = arith.subf %20, %22 : vector<8x1xf32>
    %24 = vector.broadcast %19 : vector<8x1xf32> to vector<8x128xf32>
    %25 = arith.mulf %1, %24 : vector<8x128xf32>
    %26 = vector.broadcast %23 : vector<8x1xf32> to vector<8x128xf32>
    %27 = arith.addf %25, %26 : vector<8x128xf32>
    %c0_10 = arith.constant 0 : index
    %c0_11 = arith.constant 0 : index
    %c0_12 = arith.constant 0 : index
    %28 = vector.load %arg4[%c0_10, %c0_11, %c0_12] : memref<1x8x128xf32, #tpu.memory_space<vmem>>, vector<1x8x128xf32>
    %29 = vector.shape_cast %28 : vector<1x8x128xf32> to vector<8x128xf32>
    %30 = vector.shape_cast %27 : vector<8x128xf32> to vector<1x8x128xf32>
    tpu.vector_store %arg4[%c0_10, %c0_11, %c0_12], %30 {strides = array<i32>} : memref<1x8x128xf32, #tpu.memory_space<vmem>>, vector<1x8x128xf32>,
    return
  }
  func.func @transform_0(%arg0: i32) -> (i32, i32, i32) {
    %c0_i32 = arith.constant 0 : i32
    %c0_i32_0 = arith.constant 0 : i32
    %c0_i32_1 = arith.constant 0 : i32
    return %arg0, %c0_i32, %c0_i32_0 : i32, i32, i32
  }
  func.func @transform_1(%arg0: i32) -> (i32, i32) {
    %c0_i32 = arith.constant 0 : i32
    %c0_i32_0 = arith.constant 0 : i32
    %c0_i32_1 = arith.constant 0 : i32
    return %c0_i32, %c0_i32_0 : i32, i32
  }
  func.func @transform_2(%arg0: i32) -> (i32, i32) {
    %c0_i32 = arith.constant 0 : i32
    %c0_i32_0 = arith.constant 0 : i32
    %c0_i32_1 = arith.constant 0 : i32
    return %c0_i32, %c0_i32_0 : i32, i32
  }
  func.func @transform_3(%arg0: i32) -> (i32, i32, i32) {
    %c0_i32 = arith.constant 0 : i32
    %c0_i32_0 = arith.constant 0 : i32
    %c0_i32_1 = arith.constant 0 : i32
    return %arg0, %c0_i32, %c0_i32_0 : i32, i32, i32
  }
}

</mosaic_0001>

<llo_original>
// kernel: tpu_custom_call.1
$region0: #{tpu_custom_call.1}
  #allocation0 [shape = 'u32[]', space=smem, size = 0x4, offset = 0x4, fixed_abs, tag = 'smem constant byte address 0x4 - core index']
  #allocation1 [shape = 'u32[144,128]{1,0:T(1,128)}', space=vmem, size = 0x12000, scoped, tag = 'internal scratch']
  %s0 = inlined_call_operand.vmem [shape: f32[2,8,128], index: 0, kind: input, shape index: {}]
  %s1 = inlined_call_operand.vmem [shape: f32[8,1], index: 1, kind: input, shape index: {}]
  %s2 = inlined_call_operand.vmem [shape: f32[8,1], index: 2, kind: input, shape index: {}]
  %s3 = inlined_call_operand.hbm [shape: f32[2,8,128], index: 3, kind: output, shape index: {}]
  %s4 = sld [smem:[#allocation0]]
  $region45: #{tpu_custom_call.1} parent=0
    _
  %s6 = ssub.s32 1, %s4
  %s7 = scalar_select 0, %s6, %s4
  $region1: #{tpu_custom_call.1} parent=0
    #allocation2 [shape = 'u8[8192]{0}', space=vmem, size = 0x2000, scoped, tag = 'output window, operand 0']
    #allocation3 [shape = 's32[2]{0}', space=sflag, size = 0x8, scoped, tag = 'scoped memory for tpu_custom_call.1']
    %8 = vsyncpa [#allocation3], 0
    %s9 = scalar_lea.sflag [#allocation3], 1
    %10 = vsyncpa %s9, 0
    loop: start=0, step=1, limit=4
    $region2: #{tpu_custom_call.1} parent=1 // loop_pre_header
      _
    $region3: #{tpu_custom_call.1} parent=1 // loop_header
      %s12 = sphi 0, %s16
      %p13 = scmp.ge.s32.totalorder %s12, 4
      %s22 = sphi 0, %s24
      %s25 = sphi 0, %s22
      %s26 = sphi 0, %s25
      %s42 = sphi 0, %s26
      %s46 = sphi 0, %s46
      %s48 = sphi 0, %s46
      %s49 = sphi 0, %s48
      %s63 = sphi 0, %s49
      %s67 = sphi 0, %s67
      %s69 = sphi 0, %s67
      %s70 = sphi 0, %s69
      %s84 = sphi 0, %s70
      %s90 = sphi 0, %s92
      %s93 = sphi 0, %s90
      %s94 = sphi 0, %s93
      %s110 = sphi 0, %s94
    $region4: #{tpu_custom_call.1} parent=1 // loop_header_branch
      %15 = sbr.rel (%p13) target = $region8
    $region5: #{tpu_custom_call.1} parent=1 // loop_body
      %s17 = ssub.s32 %s12, 1
      %s18 = ssub.s32 %s12, 2
      %s19 = sadd.s32 %s12, 1
      %s20 = ssub.s32 %s12, %s19
      %p21 = scmp.eq.s32.totalorder %s20, 0
      %s23 = sadd.s32 %s22, 1
      %s24 = scalar_select %p21, %s22, %s23
      %p27 = pneg %p21
      %p28 = scmp.eq.s32.totalorder %s12, 1
      %p29 = por %p27, %p28
      %p30 = scmp.ne.s32.totalorder %s22, %s25
      %p31 = scmp.eq.s32.totalorder %s12, 0
      %p32 = por %p30, %p31
      %p33 = scmp.ne.s32.totalorder %s22, %s25
      %p34 = scmp.eq.s32.totalorder %s17, 1
      %p35 = por %p33, %p34
      %p36 = scmp.ne.s32.totalorder %s25, %s26
      %p37 = scmp.eq.s32.totalorder %s17, 0
      %p38 = por %p36, %p37
      %p39 = scmp.ne.s32.totalorder %s25, %s26
      %p40 = scmp.eq.s32.totalorder %s18, 1
      %p41 = por %p39, %p40
      %p43 = scmp.ne.s32.totalorder %s26, %s42
      %p44 = scmp.eq.s32.totalorder %s18, 0
      %p45 = por %p43, %p44
      %s47 = sadd.s32 %s46, 1
      %p50 = scmp.eq.s32.totalorder %s12, 1
      %p51 = scmp.ne.s32.totalorder %s46, %s48
      %p52 = scmp.eq.s32.totalorder %s12, 0
      %p53 = por %p51, %p52
      %p54 = scmp.ne.s32.totalorder %s46, %s48
      %p55 = scmp.eq.s32.totalorder %s17, 1
      %p56 = por %p54, %p55
      %p57 = scmp.ne.s32.totalorder %s48, %s49
      %p58 = scmp.eq.s32.totalorder %s17, 0
      %p59 = por %p57, %p58
      %p60 = scmp.ne.s32.totalorder %s48, %s49
      %p61 = scmp.eq.s32.totalorder %s18, 1
      %p62 = por %p60, %p61
      %p64 = scmp.ne.s32.totalorder %s49, %s63
      %p65 = scmp.eq.s32.totalorder %s18, 0
      %p66 = por %p64, %p65
      %s68 = sadd.s32 %s67, 1
      %p71 = scmp.eq.s32.totalorder %s12, 1
      %p72 = scmp.ne.s32.totalorder %s67, %s69
      %p73 = scmp.eq.s32.totalorder %s12, 0
      %p74 = por %p72, %p73
      %p75 = scmp.ne.s32.totalorder %s67, %s69
      %p76 = scmp.eq.s32.totalorder %s17, 1
      %p77 = por %p75, %p76
      %p78 = scmp.ne.s32.totalorder %s69, %s70
      %p79 = scmp.eq.s32.totalorder %s17, 0
      %p80 = por %p78, %p79
      %p81 = scmp.ne.s32.totalorder %s69, %s70
      %p82 = scmp.eq.s32.totalorder %s18, 1
      %p83 = por %p81, %p82
      %p85 = scmp.ne.s32.totalorder %s70, %s84
      %p86 = scmp.eq.s32.totalorder %s18, 0
      %p87 = por %p85, %p86
      %s88 = ssub.s32 %s12, %s19
      %p89 = scmp.eq.s32.totalorder %s88, 0
      %s91 = sadd.s32 %s90, 1
      %s92 = scalar_select %p89, %s90, %s91
      %p95 = pneg %p89
      %p96 = scmp.eq.s32.totalorder %s12, 1
      %p97 = por %p95, %p96
      %p98 = scmp.ne.s32.totalorder %s90, %s93
      %p99 = scmp.eq.s32.totalorder %s12, 0
      %p100 = por %p98, %p99
      %p101 = scmp.ne.s32.totalorder %s90, %s93
      %p102 = scmp.eq.s32.totalorder %s17, 1
      %p103 = por %p101, %p102
      %p104 = scmp.ne.s32.totalorder %s93, %s94
      %p105 = scmp.eq.s32.totalorder %s17, 0
      %p106 = por %p104, %p105
      %p107 = scmp.ne.s32.totalorder %s93, %s94
      %p108 = scmp.eq.s32.totalorder %s18, 1
      %p109 = por %p107, %p108
      %p111 = scmp.ne.s32.totalorder %s94, %s110
      %p112 = scmp.eq.s32.totalorder %s18, 0
      %p113 = por %p111, %p112
      %p114 = scmp.le.s32.totalorder 1, %s12
      %p115 = scmp.lt.s32.totalorder %s12, 3
      %p116 = pnand %p114, %p115
      %p117 = pneg %p116
      // Predicated region
      $region9: #{tpu_custom_call.1} parent=5 // pred_check
        _
      $region10: #{tpu_custom_call.1} parent=5 // pred_check_branch
        %119 = sbr.rel (%p116) target = $region12
      $region11: #{tpu_custom_call.1} parent=5 // pred_region
        %s120 = ssub.s32 %s12, 1
        // Predicated region
        $region13: #{tpu_custom_call.1} parent=11 // pred_check
          %p121 = pneg %p59
        $region14: #{tpu_custom_call.1} parent=11 // pred_check_branch
          %123 = sbr.rel (%p121) target = $region16
        $region15: #{tpu_custom_call.1} parent=11 // pred_region
          _
        $region16: #{tpu_custom_call.1} parent=11 // pred_fallthru
          _
        // Predicated region
        $region17: #{tpu_custom_call.1} parent=11 // pred_check
          %p124 = pneg %p80
        $region18: #{tpu_custom_call.1} parent=11 // pred_check_branch
          %126 = sbr.rel (%p124) target = $region20
        $region19: #{tpu_custom_call.1} parent=11 // pred_region
          _
        $region20: #{tpu_custom_call.1} parent=11 // pred_fallthru
          _
      $region12: #{tpu_custom_call.1} parent=5 // pred_fallthru
        _
      %p127 = scmp.lt.s32.totalorder %s12, 2
      // Predicated region
      $region21: #{tpu_custom_call.1} parent=5 // pred_check
        %p128 = pneg %p127
      $region22: #{tpu_custom_call.1} parent=5 // pred_check_branch
        %130 = sbr.rel (%p128) target = $region24
      $region23: #{tpu_custom_call.1} parent=5 // pred_region
        // Predicated region
        $region25: #{tpu_custom_call.1} parent=23 // pred_check
          %p131 = pneg %p32
        $region26: #{tpu_custom_call.1} parent=23 // pred_check_branch
          %133 = sbr.rel (%p131) target = $region28
        $region27: #{tpu_custom_call.1} parent=23 // pred_region
          %p134 = scmp.lt.s32.totalorder %s12, 1
          %s135 = scalar_select %p134, %s12, 1
          %s136 = smul.addr %s135, 8
          %s137 = scalar_lea.vmem %s0, %s136
        $region28: #{tpu_custom_call.1} parent=23 // pred_fallthru
          _
      $region24: #{tpu_custom_call.1} parent=5 // pred_fallthru
        _
      %p138 = scmp.le.s32.totalorder 1, %s12
      %p139 = scmp.lt.s32.totalorder %s12, 3
      %p140 = pnand %p138, %p139
      %p141 = pneg %p140
      // Predicated region
      $region29: #{tpu_custom_call.1} parent=5 // pred_check
        _
      $region30: #{tpu_custom_call.1} parent=5 // pred_check_branch
        %143 = sbr.rel (%p140) target = $region32
      $region31: #{tpu_custom_call.1} parent=5 // pred_region
        %s144 = ssub.s32 %s12, 1
        %p145 = scmp.lt.s32.totalorder %s17, 1
        %s146 = scalar_select %p145, %s17, 1
        %s147 = smul.addr %s146, 8
        %s148 = scalar_lea.vmem %s0, %s147
        %p149 = pneg %p38
        %p150 = pneg %p35
        %p151 = pneg %p59
        %p152 = pneg %p56
        %p153 = pneg %p80
        %p154 = pneg %p77
        %p155 = pneg %p106
        %p156 = pneg %p103
        %s157 = sand.u32 %s93, 1
        %s158 = scalar_lea.sflag [#allocation3], %s157
        %s159 = sand.u32 %s93, 1
        %s160 = smul.addr %s159, 8
        %s161 = scalar_lea.vmem [#allocation2], %s160
        %p162 = scmp.lt.s32.totalorder %s17, 1
        %s163 = scalar_select %p162, %s17, 1
        %s164 = smul.addr %s163, 8
        %s165 = scalar_lea.vmem %s0, %s164
        %v166 = vld [vmem:[%s165] sm:$0xff]
        %167 = vadd.xlane.f32.xlu0 %v166
        %v168 = vpop.xlane.xlu0 %167
        %v169 = vrot.slane %v168, 4
        %v170 = vadd.f32 %v168, %v169
        %v171 = vrot.slane %v170, 2
        %v172 = vadd.f32 %v170, %v171
        %v173 = vrot.slane %v172, 1
        %v174 = vadd.f32 %v172, %v173
        %s175 = vtos %v174
        %v176 = vmul.f32 %v166, %v166
        %177 = vadd.xlane.f32.xlu0 %v176
        %v178 = vpop.xlane.xlu0 %177
        %v179 = vrot.slane %v178, 4
        %v180 = vadd.f32 %v178, %v179
        %v181 = vrot.slane %v180, 2
        %v182 = vadd.f32 %v180, %v181
        %v183 = vrot.slane %v182, 1
        %v184 = vadd.f32 %v182, %v183
        %s185 = vtos %v184
        %s186 = smul.f32 %s175, 0.0009765625
        %s187 = smul.f32 %s185, 0.0009765625
        %s188 = smul.f32 %s186, %s186
        %s189 = ssub.f32 %s187, %s188
        %s190 = sadd.f32 %s189, 1e-05
        %v191 = vstv %s190
        %v192 = vrsqrt.pop %v191
        %s193 = vtos %v192
        %v194 = vld [vmem:[%s1] sm:$0xff]
        %v195 = vstv %s193
        %v196 = vmul.f32 %v194, %v195
        %v197 = vld [vmem:[%s2] sm:$0xff]
        %v198 = vstv %s186
        %v199 = vmul.f32 %v198, %v196
        %v200 = vsub.f32 %v197, %v199
        %202 = vset.pattern.permute.xlu0 0
        %203 = vperm.xlu0 %202, %v196
        %v204 = vpop.permute.xlu0 %203
        %v206 = vmul.f32 %v166, %v204
        %208 = vset.pattern.permute.xlu0 0
        %209 = vperm.xlu0 %208, %v200
        %v210 = vpop.permute.xlu0 %209
        %v212 = vadd.f32 %v206, %v210
        %213 = vst [vmem:[%s161] sm:$0xff] %v212
        %s214 = sand.u32 %s93, 1
        %s215 = scalar_lea.sflag [#allocation3], %s214
        %s216 = sand.u32 %s93, 1
        %s217 = smul.addr %s216, 8
        %s218 = scalar_lea.vmem [#allocation2], %s217
        // Predicated region
        $region33: #{tpu_custom_call.1} parent=31 // pred_check
          %p219 = pneg %p103
        $region34: #{tpu_custom_call.1} parent=31 // pred_check_branch
          %221 = sbr.rel (%p219) target = $region36
        $region35: #{tpu_custom_call.1} parent=31 // pred_region
          %s223 = ssub.s32 128, 128
          %224 = vsyncadd %s215, %s223
          %s225 = smul.addr %s17, 128
          %s226 = scalar_lea.hbm %s3, %s225
          %s228 = sshll.u32 %s218, 4
          %s229 = int_to_ptr.vmem [resolvable:$true] %s228
          %231 = dma.vmem_to_hbm [thread:$0]  %s229, 128, %s226, %s215
        $region36: #{tpu_custom_call.1} parent=31 // pred_fallthru
          _
      $region32: #{tpu_custom_call.1} parent=5 // pred_fallthru
        _
      %p232 = scmp.le.s32.totalorder 2, %s12
      // Predicated region
      $region37: #{tpu_custom_call.1} parent=5 // pred_check
        %p233 = pneg %p232
      $region38: #{tpu_custom_call.1} parent=5 // pred_check_branch
        %235 = sbr.rel (%p233) target = $region40
      $region39: #{tpu_custom_call.1} parent=5 // pred_region
        %s236 = ssub.s32 %s12, 2
        // Predicated region
        $region41: #{tpu_custom_call.1} parent=39 // pred_check
          %p237 = pneg %p109
        $region42: #{tpu_custom_call.1} parent=39 // pred_check_branch
          %239 = sbr.rel (%p237) target = $region44
        $region43: #{tpu_custom_call.1} parent=39 // pred_region
          %s240 = sand.u32 %s94, 1
          %s241 = scalar_lea.sflag [#allocation3], %s240
          %s242 = sand.u32 %s94, 1
          %s243 = smul.addr %s242, 8
          %s244 = scalar_lea.vmem [#allocation2], %s243
          %245 = dma.done %s241, 128
        $region44: #{tpu_custom_call.1} parent=39 // pred_fallthru
          _
      $region40: #{tpu_custom_call.1} parent=5 // pred_fallthru
        _
    $region6: #{tpu_custom_call.1} parent=1 // loop_footer
      %s16 = sadd.s32 1, %s12
    $region7: #{tpu_custom_call.1} parent=1 // loop_footer_branch
      %11 = sbr.rel target = $region3
    $region8: #{tpu_custom_call.1} parent=1 // loop_exit
      _
    %246 = vsyncpa [#allocation3], 1
    %s247 = scalar_lea.sflag [#allocation3], 1
    %248 = vsyncpa %s247, 1

</llo_original>
